<compile_context>
chip_gen: v7x
topology: tpu7x:2x2x1
jax: 0.10.0
libtpu: 0.0.40
codegen_flags: <defaults>
</compile_context>

<pallas_src>
import functools

import jax
import jax.numpy as jnp
from jax.experimental import pallas as pl
from jax.experimental.pallas import tpu as pltpu


# ------------------------------- small helpers -------------------------------

def _round_up(v, m):
    return (v + m - 1) // m * m


def _sublane_mult(dtype):
    # 32-bit: 8 sublanes, 16-bit: 16, 8-bit: 32 (packed layouts).
    return max(8, 32 // jnp.dtype(dtype).itemsize)


def _vmem_caps():
    """(tile budget bytes, vmem_limit cap bytes) per TPU generation."""
    kind = ""
    try:
        kind = jax.devices()[0].device_kind.lower()
    except Exception:
        pass
    if "v7" in kind:
        # 64 MiB VMEM per TensorCore: keep the pipeline footprint ~36 MiB.
        return 36 << 20, 48 << 20
    # v5e / v6e: 128 MiB physical VMEM (scoped default is only 16/32 MiB,
    # so we raise vmem_limit_bytes explicitly below).
    return 64 << 20, 100 << 20


# ------------------------- kernel 1: pool + FC forward -----------------------

def _head_fwd_chw_kernel(x_ref, w_ref, b_ref, o_ref, *, inv_hw):
    # x_ref: (tile_n, C, HW)   w_ref: (C, Kp)   b_ref: (1, Kp)   o_ref: (tile_n, Kp)
    x = x_ref[...]
    # Global average pool over the lane (HW) axis; accumulate in f32.
    pooled = jnp.sum(x.astype(jnp.float32), axis=-1) * inv_hw        # (tile_n, C)
    logits = jnp.dot(pooled.astype(w_ref.dtype), w_ref[...],
                     preferred_element_type=jnp.float32)
    o_ref[...] = (logits + b_ref[...].astype(jnp.float32)).astype(o_ref.dtype)


def _head_fwd_hwc_kernel(x_ref, w_ref, b_ref, o_ref, *, inv_hw):
    # x_ref: (tile_n, HW, C) — C on lanes: pool is a sublane/VALU reduction.
    x = x_ref[...]
    pooled = jnp.sum(x.astype(jnp.float32), axis=1) * inv_hw         # (tile_n, C)
    logits = jnp.dot(pooled.astype(w_ref.dtype), w_ref[...],
                     preferred_element_type=jnp.float32)
    o_ref[...] = (logits + b_ref[...].astype(jnp.float32)).astype(o_ref.dtype)


def _run_head(x3, w, b, *, layout):
    """x3: (N, C, HW) if layout=='chw', (N, HW, C) if layout=='hwc'."""
    N, d1, d2 = x3.shape
    if layout == "chw":
        C, HW = d1, d2
    else:
        HW, C = d1, d2
    assert C == w.shape[0], "in_channels mismatch"
    K = w.shape[1]
    Kp = _round_up(K, 128)                         # lane-dense class dim

    # Zero-pad FC weight / bias to Kp (padded logits sliced off below).
    w_p = jnp.pad(w, ((0, 0), (0, Kp - K))) if Kp != K else w
    b_p = (jnp.pad(b, ((0, Kp - K),)) if Kp != K else b).reshape(1, Kp)

    # --- VMEM footprint math (real padded-tile layout) -----------------------
    itemsize = jnp.dtype(x3.dtype).itemsize
    sub = _sublane_mult(x3.dtype)
    if layout == "chw":
        plane_bytes = _round_up(C, sub) * _round_up(HW, 128) * itemsize
    else:
        plane_bytes = _round_up(HW, sub) * _round_up(C, 128) * itemsize

    w_item = jnp.dtype(w_p.dtype).itemsize
    w_bytes = _round_up(C, _sublane_mult(w_p.dtype)) * Kp * w_item   # single-buffered
    b_bytes = 2 * 8 * Kp * 4                                         # tiny
    out_row = Kp * 4                                                 # f32 output

    budget, limit_cap = _vmem_caps()
    per_n = 2 * plane_bytes + 2 * out_row            # double-buffered x + out per sample
    avail = max(budget - w_bytes - b_bytes, per_n)   # always allow at least 1 sample
    tile_n = max(1, avail // per_n)

    if tile_n >= N:
        tile_n = N
        if N >= 16:
            # Give the megacore ("parallel") axis at least 2 grid steps.
            tile_n = max(8, ((N // 2) // 8) * 8)
    else:
        # Round DOWN to a multiple of 8 (output block sublane constraint).
        tile_n = max(8, (tile_n // 8) * 8)

    grid = (pl.cdiv(N, tile_n),)                     # partial last block: OOB reads,
                                                     # masked writes; no jnp.pad of x.

    footprint = (2 * tile_n * plane_bytes + w_bytes + b_bytes
                 + 2 * _round_up(tile_n, 8) * out_row)
    vmem_limit = int(min(limit_cap, max(32 << 20, footprint + (8 << 20))))

    kernel = functools.partial(
        _head_fwd_chw_kernel if layout == "chw" else _head_fwd_hwc_kernel,
        inv_hw=1.0 / HW)

    out = pl.pallas_call(
        kernel,
        out_shape=jax.ShapeDtypeStruct((N, Kp), jnp.float32),
        grid=grid,
        in_specs=[
            pl.BlockSpec((tile_n, d1, d2), lambda i: (i, 0, 0)),
            # Grid-invariant operands: single-buffered (no 2nd VMEM copy).
            pl.BlockSpec((C, Kp), lambda i: (0, 0), pipeline_mode=pl.Buffered(1)),
            pl.BlockSpec((1, Kp), lambda i: (0, 0), pipeline_mode=pl.Buffered(1)),
        ],
        out_specs=pl.BlockSpec((tile_n, Kp), lambda i: (i, 0)),
        compiler_params=pltpu.CompilerParams(
            dimension_semantics=("parallel",),
            vmem_limit_bytes=vmem_limit),
    )(x3, w_p, b_p)
    return out[:, :K]


def head_forward(x_nchw, w, b):
    """NCHW entry (module semantics). Free reshape to (N, C, HW); x may be bf16."""
    N, C, H, W = x_nchw.shape
    return _run_head(x_nchw.reshape(N, C, H * W), w, b, layout="chw")


def head_forward_nhwc(x_nhwc, w, b):
    """NHWC / (N, HW, C) fast path: C lane-dense, pool is a sublane reduce."""
    if x_nhwc.ndim == 4:
        N, H, W, C = x_nhwc.shape
        x3 = x_nhwc.reshape(N, H * W, C)
    else:
        x3 = x_nhwc
    return _run_head(x3, w, b, layout="hwc")


# --------------------------- kernel 2: cross-entropy loss --------------------

def _ce_loss_kernel(s_ref, lbl_ref, o_ref, *, n_total):
    # s_ref: (tile, K) logits, lbl_ref: (tile, 1) int32, o_ref: (1, 128) resident acc
    i = pl.program_id(0)

    @pl.when(i == 0)
    def _():
        o_ref[...] = jnp.zeros_like(o_ref)

    s = s_ref[...].astype(jnp.float32)
    lbl = lbl_ref[...]
    tile = s.shape[0]

    # Mask rows past n_total (partial last block reads OOB garbage).
    row = jax.lax.broadcasted_iota(jnp.int32, (tile, 1), 0) + i * tile
    valid = row < n_total

    # In-kernel one-hot via iota compare — no materialized (N, K) one-hot.
    col = jax.lax.broadcasted_iota(jnp.int32, s.shape, 1)
    is_tgt = col == lbl
    m = jnp.max(s, axis=-1, keepdims=True)
    lse = jnp.log(jnp.sum(jnp.exp(s - m), axis=-1, keepdims=True)) + m
    tgt = jnp.sum(jnp.where(is_tgt, s, 0.0), axis=-1, keepdims=True)
    nll = jnp.where(valid, lse - tgt, 0.0)                    # (tile, 1)

    o_ref[...] = o_ref[...] + jnp.sum(nll, axis=0, keepdims=True)

    @pl.when(i == pl.num_programs(0) - 1)
    def _():
        o_ref[...] = o_ref[...] * (1.0 / n_total)


def cross_entropy_loss(cls_score, labels, *, tile_budget_bytes=8 * 1024 * 1024):
    """PyTorch nn.CrossEntropyLoss(cls_score, int labels) equivalent."""
    N, K = cls_score.shape
    lbl = labels.astype(jnp.int32).reshape(N, 1)

    # Batch-tile so the logits block (double-buffered + temporaries) stays small.
    Kp = _round_up(K, 128)
    per_row = 6 * Kp * 4                      # 2x buffers + exp temporaries headroom
    tile_n = max(1, tile_budget_bytes // per_row)
    if tile_n >= N:
        tile_n = N
    else:
        tile_n = max(8, (tile_n // 8) * 8)

    out = pl.pallas_call(
        functools.partial(_ce_loss_kernel, n_total=N),
        out_shape=jax.ShapeDtypeStruct((1, 128), jnp.float32),
        grid=(pl.cdiv(N, tile_n),),
        in_specs=[
            pl.BlockSpec((tile_n, K), lambda i: (i, 0)),
            pl.BlockSpec((tile_n, 1), lambda i: (i, 0)),
        ],
        out_specs=pl.BlockSpec((1, 128), lambda i: (0, 0)),
        compiler_params=pltpu.CompilerParams(
            dimension_semantics=("arbitrary",)),
    )(cls_score.astype(jnp.float32), lbl)
    return out[0, 0]


# --------------------------------- BaseHead ----------------------------------

class BaseHeadPallas:
    """Minimal concrete BaseHead: avg-pool + FC forward, CE loss + metrics."""

    def __init__(self, num_classes, in_channels, multi_class=False,
                 label_smooth_eps=0.0, topk=(1, 5), loss_weight=1.0):
        self.num_classes = num_classes
        self.in_channels = in_channels
        self.multi_class = multi_class
        self.label_smooth_eps = label_smooth_eps
        if isinstance(topk, int):
            topk = (topk,)
        for _topk in topk:
            assert _topk > 0, 'Top-k should be larger than 0'
        self.topk = topk
        self.loss_weight = loss_weight
        self.init_weights()

    def init_weights(self):
        # normal_init(std=0.01) on fc weight, zeros on bias (deterministic).
        key = jax.random.PRNGKey(0)
        self.fc_w = (0.01 * jax.random.normal(
            key, (self.in_channels, self.num_classes))).astype(jnp.float32)
        self.fc_b = jnp.zeros((self.num_classes,), jnp.float32)

    def forward(self, x):
        """x: (N, C, H, W) — module-parity NCHW path."""
        return head_forward(x, self.fc_w, self.fc_b)

    def forward_nhwc(self, x):
        """x: (N, H, W, C) or (N, HW, C) — preferred TPU layout (C lane-dense)."""
        return head_forward_nhwc(x, self.fc_w, self.fc_b)

    def loss(self, cls_score, labels):
        losses = {}
        if labels.ndim == 0:
            labels = labels[None]
        single_label = (not self.multi_class) and cls_score.shape != labels.shape
        if single_label:
            # top-k / mean-class accuracy: metric glue (PyTorch does this on
            # detached numpy on the host) — plain JAX, lax.top_k (no full sort).
            maxk = min(max(self.topk), self.num_classes)
            _, topk_idx = jax.lax.top_k(cls_score, maxk)
            for k in self.topk:
                kk = min(k, maxk)
                hit = jnp.any(topk_idx[:, :kk] == labels[:, None], axis=-1)
                losses[f'top{k}_acc'] = jnp.mean(hit.astype(jnp.float32))
            preds = jnp.argmax(cls_score, axis=-1)
            per_class_hits = jnp.zeros((self.num_classes,)).at[labels].add(
                (preds == labels).astype(jnp.float32))
            per_class_cnt = jnp.zeros((self.num_classes,)).at[labels].add(1.0)
            valid = per_class_cnt > 0
            losses['mean_acc'] = jnp.sum(
                jnp.where(valid, per_class_hits / jnp.maximum(per_class_cnt, 1.0), 0.0)
            ) / jnp.maximum(jnp.sum(valid.astype(jnp.float32)), 1.0)
        elif self.multi_class and self.label_smooth_eps != 0:
            labels = ((1 - self.label_smooth_eps) * labels
                      + self.label_smooth_eps / self.num_classes)

        if single_label:
            loss_cls = cross_entropy_loss(cls_score, labels)
        else:
            # TODO(synk): mmaction's multi-class head uses BCE-with-logits; soft-label
            # cross-entropy kept in plain JAX here.
            logp = jax.nn.log_softmax(cls_score, axis=-1)
            loss_cls = -jnp.mean(jnp.sum(labels * logp, axis=-1))
        losses['loss_cls'] = self.loss_weight * loss_cls
        return losses


# ----------------------------------- main ------------------------------------

if __name__ == "__main__":
    N, C, H, W = 2, 32, 8, 8
    NUM_CLASSES = 16

    key = jax.random.PRNGKey(0)
    kx, kl = jax.random.split(key)
    x = jax.random.normal(kx, (N, C, H, W), dtype=jnp.float32)
    labels = jax.random.randint(kl, (N,), 0, NUM_CLASSES)

    head = BaseHeadPallas(num_classes=NUM_CLASSES, in_channels=C)

    # NCHW (module-parity) path.
    cls_score = head.forward(x)
    losses = head.loss(cls_score, labels)

    # NHWC (TPU-preferred) path — same math, C lane-dense.
    x_nhwc = jnp.transpose(x, (0, 2, 3, 1))
    cls_score_nhwc = head.forward_nhwc(x_nhwc)

    jax.block_until_ready(cls_score)
    jax.block_until_ready(cls_score_nhwc)
    jax.block_until_ready(losses['loss_cls'])

    # sanity check against pure-JAX reference
    pooled_ref = jnp.mean(x, axis=(2, 3))
    score_ref = pooled_ref @ head.fc_w + head.fc_b
    logp = jax.nn.log_softmax(score_ref, axis=-1)
    loss_ref = -jnp.mean(logp[jnp.arange(N), labels])
    assert jnp.allclose(cls_score, score_ref, atol=1e-5), "forward (NCHW) mismatch"
    assert jnp.allclose(cls_score_nhwc, score_ref, atol=1e-5), "forward (NHWC) mismatch"
    assert jnp.allclose(losses['loss_cls'], loss_ref, atol=1e-5), "loss mismatch"

    print("KERNEL_OK")
</pallas_src>

<mosaic_0001>
module attributes {stable_mosaic.version = 11 : i64} {
  func.func @_head_fwd_chw_kernel(%arg0: i32, %arg1: memref<2x32x64xf32, #tpu.memory_space<vmem>>, %arg2: memref<32x128xf32, #tpu.memory_space<vmem>>, %arg3: memref<1x128xf32, #tpu.memory_space<vmem>>, %arg4: memref<2x128xf32, #tpu.memory_space<vmem>>) attributes {dimension_semantics = [#tpu.dimension_semantics<parallel>], iteration_bounds = array<i64: 1>, scalar_prefetch = 0 : i64, scratch_operands = 0 : i64, tpu.core_type = #tpu.core_type<tc>, window_params = [{transform_indices = @transform_0, window_bounds = array<i64: 2, 32, 64>}, {pipeline_mode = #tpu.pipeline_mode<synchronous>, transform_indices = @transform_1, window_bounds = array<i64: 32, 128>}, {pipeline_mode = #tpu.pipeline_mode<synchronous>, transform_indices = @transform_2, window_bounds = array<i64: 1, 128>}, {transform_indices = @transform_3, window_bounds = array<i64: 2, 128>}]} {
    %c0 = arith.constant 0 : index
    %c0_0 = arith.constant 0 : index
    %c0_1 = arith.constant 0 : index
    %0 = vector.load %arg1[%c0, %c0_0, %c0_1] : memref<2x32x64xf32, #tpu.memory_space<vmem>>, vector<2x32x64xf32>
    %cst = arith.constant dense<0.000000e+00> : vector<2x32xf32>
    %1 = vector.multi_reduction <add>, %0, %cst [2] : vector<2x32x64xf32> to vector<2x32xf32>
    %cst_2 = arith.constant 1.562500e-02 : f32
    %2 = vector.broadcast %cst_2 : f32 to vector<2x32xf32>
    %3 = arith.mulf %1, %2 : vector<2x32xf32>
    %c0_3 = arith.constant 0 : index
    %c0_4 = arith.constant 0 : index
    %4 = vector.load %arg2[%c0_3, %c0_4] : memref<32x128xf32, #tpu.memory_space<vmem>>, vector<32x128xf32>
    %cst_5 = arith.constant dense<0.000000e+00> : vector<2x128xf32>
    %5 = tpu.matmul %3, %4, %cst_5 {dimension_numbers = #tpu.dot_dimension_numbers<[1], [0], [0], [1], [0, 0, 1, 1], [], []>} : vector<2x32xf32>, vector<32x128xf32>, vector<2x128xf32> -> vector<2x128xf32>
    %c0_6 = arith.constant 0 : index
    %c0_7 = arith.constant 0 : index
    %6 = vector.load %arg3[%c0_6, %c0_7] : memref<1x128xf32, #tpu.memory_space<vmem>>, vector<1x128xf32>
    %7 = vector.broadcast %6 : vector<1x128xf32> to vector<2x128xf32>
    %8 = arith.addf %5, %7 : vector<2x128xf32>
    %c0_8 = arith.constant 0 : index
    %c0_9 = arith.constant 0 : index
    %9 = vector.load %arg4[%c0_8, %c0_9] : memref<2x128xf32, #tpu.memory_space<vmem>>, vector<2x128xf32>
    tpu.vector_store %arg4[%c0_8, %c0_9], %8 {strides = array<i32>} : memref<2x128xf32, #tpu.memory_space<vmem>>, vector<2x128xf32>,
    return
  }
  func.func @transform_0(%arg0: i32) -> (i32, i32, i32) {
    %c0_i32 = arith.constant 0 : i32
    %c0_i32_0 = arith.constant 0 : i32
    %c0_i32_1 = arith.constant 0 : i32
    return %arg0, %c0_i32, %c0_i32_0 : i32, i32, i32
  }
  func.func @transform_1(%arg0: i32) -> (i32, i32) {
    %c0_i32 = arith.constant 0 : i32
    %c0_i32_0 = arith.constant 0 : i32
    %c0_i32_1 = arith.constant 0 : i32
    return %c0_i32, %c0_i32_0 : i32, i32
  }
  func.func @transform_2(%arg0: i32) -> (i32, i32) {
    %c0_i32 = arith.constant 0 : i32
    %c0_i32_0 = arith.constant 0 : i32
    %c0_i32_1 = arith.constant 0 : i32
    return %c0_i32, %c0_i32_0 : i32, i32
  }
  func.func @transform_3(%arg0: i32) -> (i32, i32) {
    %c0_i32 = arith.constant 0 : i32
    %c0_i32_0 = arith.constant 0 : i32
    return %arg0, %c0_i32 : i32, i32
  }
}

</mosaic_0001>

<llo_original>
// kernel: tpu_custom_call.1
$region0: #{tpu_custom_call.1}
  #allocation0 [shape = 'u32[]', space=smem, size = 0x4, offset = 0x4, fixed_abs, tag = 'smem constant byte address 0x4 - core index']
  #allocation1 [shape = 'u32[144,128]{1,0:T(1,128)}', space=vmem, size = 0x12000, scoped, tag = 'internal scratch']
  %s0 = inlined_call_operand.hbm [shape: f32[2,32,64], index: 0, kind: input, shape index: {}]
  %s1 = inlined_call_operand.hbm [shape: f32[32,128], index: 1, kind: input, shape index: {}]
  %s2 = inlined_call_operand.vmem [shape: f32[1,128], index: 2, kind: input, shape index: {}]
  %s3 = inlined_call_operand.hbm [shape: f32[2,128], index: 3, kind: output, shape index: {}]
  %s4 = sld [smem:[#allocation0]]
  $region30: #{tpu_custom_call.1} parent=0
    _
  %s6 = ssub.s32 1, %s4
  %s7 = scalar_select 0, %s6, %s4
  $region1: #{tpu_custom_call.1} parent=0
    #allocation2 [shape = 'u8[32768]{0}', space=vmem, size = 0x8000, scoped, tag = 'input window, operand 0, single buffered']
    #allocation3 [shape = 's32[1]{0}', space=sflag, size = 0x4, scoped, tag = 'scoped memory for tpu_custom_call.1']
    #allocation4 [shape = 's32[1]{0}', space=sflag, size = 0x4, scoped, tag = 'scoped memory for tpu_custom_call.1']
    #allocation5 [shape = 'u8[16384]{0}', space=vmem, size = 0x4000, scoped, tag = 'input window, operand 1, single buffered']
    #allocation6 [shape = 's32[1]{0}', space=sflag, size = 0x4, scoped, tag = 'scoped memory for tpu_custom_call.1']
    #allocation7 [shape = 'u8[1024]{0}', space=vmem, size = 0x400, scoped, tag = 'output window, operand 0, single buffered']
    %8 = vsyncpa [#allocation3], 0
    %9 = vsyncpa [#allocation6], 0
    %10 = vsyncpa [#allocation4], 0
    // Predicated region
    $region2: #{tpu_custom_call.1} parent=1 // pred_check
      _
    $region3: #{tpu_custom_call.1} parent=1 // pred_check_branch
      %12 = sbr.rel (0) target = $region5
    $region4: #{tpu_custom_call.1} parent=1 // pred_region
      %s14 = ssub.s32 1024, 1024
      %15 = vsyncadd [#allocation3], %s14
      %s16 = sshll.u32 [#allocation2], 4
      %s17 = int_to_ptr.vmem [resolvable:$true] %s16
      %22 = dma.hbm_to_vmem [thread:$0]  %s0, 1024, %s17, [#allocation3], 128, 128, 8
    $region5: #{tpu_custom_call.1} parent=1 // pred_fallthru
      _
    // Predicated region
    $region6: #{tpu_custom_call.1} parent=1 // pred_check
      _
    $region7: #{tpu_custom_call.1} parent=1 // pred_check_branch
      %24 = sbr.rel (0) target = $region9
    $region8: #{tpu_custom_call.1} parent=1 // pred_region
      %s26 = ssub.s32 512, 512
      %27 = vsyncadd [#allocation6], %s26
      %s28 = sshll.u32 [#allocation5], 4
      %s29 = int_to_ptr.vmem [resolvable:$true] %s28
      %34 = dma.hbm_to_vmem [thread:$0]  %s1, 512, %s29, [#allocation6], 128, 128, 8
    $region9: #{tpu_custom_call.1} parent=1 // pred_fallthru
      _
    // Predicated region
    $region10: #{tpu_custom_call.1} parent=1 // pred_check
      _
    $region11: #{tpu_custom_call.1} parent=1 // pred_check_branch
      %36 = sbr.rel (0) target = $region13
    $region12: #{tpu_custom_call.1} parent=1 // pred_region
      _
    $region13: #{tpu_custom_call.1} parent=1 // pred_fallthru
      _
    // Predicated region
    $region14: #{tpu_custom_call.1} parent=1 // pred_check
      _
    $region15: #{tpu_custom_call.1} parent=1 // pred_check_branch
      %38 = sbr.rel (0) target = $region17
    $region16: #{tpu_custom_call.1} parent=1 // pred_region
      %39 = dma.done [#allocation3], 1024
    $region17: #{tpu_custom_call.1} parent=1 // pred_fallthru
      _
    // Predicated region
    $region18: #{tpu_custom_call.1} parent=1 // pred_check
      _
    $region19: #{tpu_custom_call.1} parent=1 // pred_check_branch
      %41 = sbr.rel (0) target = $region21
    $region20: #{tpu_custom_call.1} parent=1 // pred_region
      %42 = dma.done [#allocation6], 512
    $region21: #{tpu_custom_call.1} parent=1 // pred_fallthru
      _
    %v43 = vld [vmem:[#allocation2] sm:$0xff]
    %v44 = vld [vmem:[#allocation2 + $0x8] sm:$0xff]
    %v45 = vld [vmem:[#allocation2 + $0x10] sm:$0xff]
    %v46 = vld [vmem:[#allocation2 + $0x18] sm:$0xff]
    %v47 = vld [vmem:[#allocation2 + $0x20] sm:$0xff]
    %v48 = vld [vmem:[#allocation2 + $0x28] sm:$0xff]
    %v49 = vld [vmem:[#allocation2 + $0x30] sm:$0xff]
    %v50 = vld [vmem:[#allocation2 + $0x38] sm:$0xff]
    %vm51 = vcmask 523264
    %v52 = vsel %vm51, %v43, 0.0
    %53 = vadd.xlane.f32.xlu0 %v52
    %v54 = vpop.xlane.xlu0 %53
    %v55 = vsel %vm51, %v44, 0.0
    %56 = vadd.xlane.f32.xlu0 %v55
    %v57 = vpop.xlane.xlu0 %56
    %v58 = vsel %vm51, %v45, 0.0
    %59 = vadd.xlane.f32.xlu0 %v58
    %v60 = vpop.xlane.xlu0 %59
    %v61 = vsel %vm51, %v46, 0.0
    %62 = vadd.xlane.f32.xlu0 %v61
    %v63 = vpop.xlane.xlu0 %62
    %v64 = vsel %vm51, %v47, 0.0
    %65 = vadd.xlane.f32.xlu0 %v64
    %v66 = vpop.xlane.xlu0 %65
    %v67 = vsel %vm51, %v48, 0.0
    %68 = vadd.xlane.f32.xlu0 %v67
    %v69 = vpop.xlane.xlu0 %68
    %v70 = vsel %vm51, %v49, 0.0
    %71 = vadd.xlane.f32.xlu0 %v70
    %v72 = vpop.xlane.xlu0 %71
    %v73 = vsel %vm51, %v50, 0.0
    %74 = vadd.xlane.f32.xlu0 %v73
    %v75 = vpop.xlane.xlu0 %74
    %v76 = vmul.f32 %v54, 0.015625
    %v77 = vmul.f32 %v57, 0.015625
    %v78 = vmul.f32 %v60, 0.015625
    %v79 = vmul.f32 %v63, 0.015625
    %v80 = vmul.f32 %v66, 0.015625
    %v81 = vmul.f32 %v69, 0.015625
    %v82 = vmul.f32 %v72, 0.015625
    %v83 = vmul.f32 %v75, 0.015625
    %v84 = vld [vmem:[#allocation5] sm:$0xff]
    %v85 = vld [vmem:[#allocation5 + $0x8] sm:$0xff]
    %v86 = vld [vmem:[#allocation5 + $0x10] sm:$0xff]
    %v87 = vld [vmem:[#allocation5 + $0x18] sm:$0xff]
    %v88 = vld [vmem:[%s2] sm:$0x1]
    %v90 = vlaneseq
    %v91 = vshrl.u32 %v90, 7
    %v92 = vsub.s32 0, %v91
    %v93 = vrot.slane %v88, %v92
    %v103 = vlaneseq
    %v104 = vand.u32 %v103, 127
    %v105 = vlaneseq
    %v106 = vshrl.u32 %v105, 7
    %v107 = vsub.s32 %v104, %v106
    %v108 = vrot.slane %v76, %v107
    %v109 = vadd.s32 %v104, 4294967288
    %v110 = vlaneseq
    %v111 = vshrl.u32 %v110, 7
    %v112 = vsub.s32 %v109, %v111
    %v113 = vrot.slane %v77, %v112
    %vm114 = vcmask 130112
    %v115 = vsel %vm114, %v113, %v108
    %v116 = vadd.s32 %v104, 4294967280
    %v117 = vlaneseq
    %v118 = vshrl.u32 %v117, 7
    %v119 = vsub.s32 %v116, %v118
    %v120 = vrot.slane %v78, %v119
    %vm121 = vcmask 195712
    %v122 = vsel %vm121, %v120, %v115
    %v123 = vadd.s32 %v104, 4294967272
    %v124 = vlaneseq
    %v125 = vshrl.u32 %v124, 7
    %v126 = vsub.s32 %v123, %v125
    %v127 = vrot.slane %v79, %v126
    %vm128 = vcmask 261312
    %v129 = vsel %vm128, %v127, %v122
    %v130 = vlaneseq
    %v131 = vshrl.u32 %v130, 7
    %v132 = vsub.s32 %v104, %v131
    %v133 = vrot.slane %v80, %v132
    %v134 = vlaneseq
    %v135 = vshrl.u32 %v134, 7
    %v136 = vsub.s32 %v109, %v135
    %v137 = vrot.slane %v81, %v136
    %v138 = vsel %vm114, %v137, %v133
    %v139 = vlaneseq
    %v140 = vshrl.u32 %v139, 7
    %v141 = vsub.s32 %v116, %v140
    %v142 = vrot.slane %v82, %v141
    %v143 = vsel %vm121, %v142, %v138
    %v144 = vlaneseq
    %v145 = vshrl.u32 %v144, 7
    %v146 = vsub.s32 %v123, %v145
    %v147 = vrot.slane %v83, %v146
    %v148 = vsel %vm128, %v147, %v143
    %vm149 = vcmask 1041409
    %v150 = vsel %vm149, %v148, %v129
    %vm151 = vcmask 261120
    %v152 = vsel %vm151, %v150, 0
    %154 = vmatprep.subr.mxu0 0.0
    %155 = vmatpush1.msra.mxu0 %v84
    %156 = vmatprep.subr.mxu0 0.0
    %157 = vmatpush1.msra.mxu0 %v85
    %158 = vmatprep.subr.mxu0 0.0
    %159 = vmatpush1.msra.mxu0 %v86
    %160 = vmatprep.subr.mxu0 0.0
    %161 = vmatpush1.msra.mxu0 %v87
    %162 = vmatprep.subr.mxu0 0.0
    %163 = vmatpush1.msra.mxu0 0.0
    %164 = vmatprep.subr.mxu0 0.0
    %165 = vmatpush1.msra.mxu0 0.0
    %166 = vmatprep.subr.mxu0 0.0
    %167 = vmatpush1.msra.mxu0 0.0
    %168 = vmatprep.subr.mxu0 0.0
    %169 = vmatpush1.msra.mxu0 0.0
    %170 = vmatprep.subr.mxu0 0.0
    %171 = vmatpush1.msra.mxu0 0.0
    %172 = vmatprep.subr.mxu0 0.0
    %173 = vmatpush1.msra.mxu0 0.0
    %174 = vmatprep.subr.mxu0 0.0
    %175 = vmatpush1.msra.mxu0 0.0
    %176 = vmatprep.subr.mxu0 0.0
    %177 = vmatpush1.msra.mxu0 0.0
    %178 = vmatprep.subr.mxu0 0.0
    %179 = vmatpush1.msra.mxu0 0.0
    %180 = vmatprep.subr.mxu0 0.0
    %181 = vmatpush1.msra.mxu0 0.0
    %182 = vmatprep.subr.mxu0 0.0
    %183 = vmatpush1.msra.mxu0 0.0
    %184 = vmatprep.subr.mxu0 0.0
    %185 = vmatpush1.msra.mxu0 0.0
    %186 = vmatprep.subr.mxu0 0.0
    %187 = vmatpush1.msra.mxu0 0.0
    %188 = vmatprep.subr.mxu0 0.0
    %189 = vmatpush1.msra.mxu0 0.0
    %190 = vmatprep.subr.mxu0 0.0
    %191 = vmatpush1.msra.mxu0 0.0
    %192 = vmatprep.subr.mxu0 0.0
    %193 = vmatpush1.msra.mxu0 0.0
    %194 = vmatprep.subr.mxu0 0.0
    %195 = vmatpush1.msra.mxu0 0.0
    %196 = vmatprep.subr.mxu0 0.0
    %197 = vmatpush1.msra.mxu0 0.0
    %198 = vmatprep.subr.mxu0 0.0
    %199 = vmatpush1.msra.mxu0 0.0
    %200 = vmatprep.subr.mxu0 0.0
    %201 = vmatpush1.msra.mxu0 0.0
    %202 = vmatprep.subr.mxu0 0.0
    %203 = vmatpush1.msra.mxu0 0.0
    %204 = vmatprep.subr.mxu0 0.0
    %205 = vmatpush1.msra.mxu0 0.0
    %206 = vmatprep.subr.mxu0 0.0
    %207 = vmatpush1.msra.mxu0 0.0
    %208 = vmatprep.subr.mxu0 0.0
    %209 = vmatpush1.msra.mxu0 0.0
    %210 = vmatprep.subr.mxu0 0.0
    %211 = vmatpush1.msra.mxu0 0.0
    %212 = vmatprep.subr.mxu0 0.0
    %213 = vmatpush1.msra.mxu0 0.0
    %214 = vmatprep.subr.mxu0 0.0
    %215 = vmatpush1.msra.mxu0 0.0
    %216 = vmatprep.subr.mxu0 0.0
    %217 = vmatpush1.msra.mxu0 0.0
    %218 = vmatprep.mubr.f32.mxu0 0.0
    %219 = vmatmul.mubr.f32.gmra.mrb[0].mxu0 %v152
    %v220 = vpop.f32.mrb[0].mxu0
    %v221 = vadd.f32 %v93, %v220
    %v222 = vpop.f32.mrb[0].mxu0
    %223 = vdwg.mxu0
    %224 = vst [vmem:[#allocation7] sm:$0x3] %v221
    // Predicated region
    $region22: #{tpu_custom_call.1} parent=1 // pred_check
      _
    $region23: #{tpu_custom_call.1} parent=1 // pred_check_branch
      %226 = sbr.rel (0) target = $region25
    $region24: #{tpu_custom_call.1} parent=1 // pred_region
      %s228 = ssub.s32 32, 32
      %229 = vsyncadd [#allocation4], %s228
      %s231 = sshll.u32 [#allocation7], 4
      %s232 = int_to_ptr.vmem [resolvable:$true] %s231
      %234 = dma.vmem_to_hbm [thread:$0]  %s232, 32, %s3, [#allocation4]
    $region25: #{tpu_custom_call.1} parent=1 // pred_fallthru
      _
    // Predicated region
    $region26: #{tpu_custom_call.1} parent=1 // pred_check
      _
    $region27: #{tpu_custom_call.1} parent=1 // pred_check_branch
      %236 = sbr.rel (0) target = $region29
    $region28: #{tpu_custom_call.1} parent=1 // pred_region
      %237 = dma.done [#allocation4], 32
    $region29: #{tpu_custom_call.1} parent=1 // pred_fallthru
      _
    %238 = vsyncpa [#allocation3], 1
    %239 = vsyncpa [#allocation6], 1
    %240 = vsyncpa [#allocation4], 1

</llo_original>
